<compile_context>
chip_gen: v6e
topology: v6e:2x2x1
jax: 0.10.0
libtpu: 0.0.40
codegen_flags: <defaults>
</compile_context>

<pallas_src>
import jax
import jax.numpy as jnp
import numpy as np
from jax.experimental import pallas as pl
from jax.experimental.pallas import tpu as pltpu


def _round_up(x, m):
    return (x + m - 1) // m * m


def _is_v7x():
    try:
        kind = jax.devices()[0].device_kind.lower()
        return "v7" in kind
    except Exception:
        return False


def flat_model_kernel(x_ref, rw_ref, ebf_ref, w1_ref, b1_ref,
                      w2_ref, b2_ref, wh_ref, bh_ref, out_ref):
    # x_ref: (TB, F) float32 -- raw numerical features for this batch tile.
    mxu_dtype = w1_ref.dtype

    # --- NumEmbeddings (['linear', 'relu']): per-feature affine tokenizer + ReLU.
    # The tokenizer weight is pre-folded into a block-diagonal (F, F*D) matrix,
    # so the flattened embedding emb.flatten(1,2) is one tiny K=F matmul (f32
    # operands -- negligible work, full x precision) plus the flattened bias.
    emb = jnp.maximum(
        jnp.dot(x_ref[...], rw_ref[...], preferred_element_type=jnp.float32)
        + ebf_ref[...], 0.0)

    # --- MLP baseline: Linear -> ReLU -> Linear -> ReLU -> head Linear ---
    h1 = jnp.maximum(
        jnp.dot(emb.astype(mxu_dtype), w1_ref[...],
                preferred_element_type=jnp.float32) + b1_ref[...], 0.0)
    h2 = jnp.maximum(
        jnp.dot(h1.astype(mxu_dtype), w2_ref[...],
                preferred_element_type=jnp.float32) + b2_ref[...], 0.0)
    out = jnp.dot(h2.astype(mxu_dtype), wh_ref[...],
                  preferred_element_type=jnp.float32) + bh_ref[...]
    out_ref[...] = out.astype(out_ref.dtype)


def flat_model_forward(x_num, params, *, tile_b=1024, mxu_dtype=jnp.bfloat16):
    B, F = x_num.shape
    ew, eb, w1, b1, w2, b2, wh, bh = params
    D = ew.shape[1]
    FD = F * D
    H1 = w1.shape[1]
    H2 = w2.shape[1]
    d_out = wh.shape[1]
    d_out_pad = _round_up(d_out, 128)          # lane-dense output block

    is_v7x = _is_v7x()

    # Batch tile: as large as the batch allows (multiple of 8).  Only on v7x
    # (two TensorCores, "parallel" grid axes shard across them) force >= 2 grid
    # steps / an even step count; on v5e/v6e the grid is a serial loop and
    # splitting just adds per-step overhead.
    tb = min(_round_up(tile_b, 8), _round_up(B, 8))
    if is_v7x and B > 8 and pl.cdiv(B, tb) < 2:
        tb = _round_up(pl.cdiv(B, 2), 8)
    grid_b = pl.cdiv(B, tb)
    if is_v7x and grid_b > 1 and grid_b % 2 == 1:
        tb = _round_up(pl.cdiv(B, grid_b + 1), 8)
        grid_b = pl.cdiv(B, tb)
    b_pad = grid_b * tb

    # Layout plumbing only (no compute hoisted out of the kernel):
    #  * pad the small raw (B, F) input so the batch is a whole number of tiles
    #    (padded rows are independent and sliced off below),
    #  * fold the tokenizer weight into a block-diagonal (F, F*D) matrix and
    #    flatten the tokenizer bias to (1, F*D),
    #  * zero-pad the head weight/bias to 128 output lanes (unmasked stores).
    x_f32 = x_num.astype(jnp.float32)
    if b_pad != B:
        x_f32 = jnp.pad(x_f32, ((0, b_pad - B), (0, 0)))
    rw = (jnp.eye(F, dtype=jnp.float32)[:, :, None]
          * ew.astype(jnp.float32)[None, :, :]).reshape(F, FD)
    ebf = eb.reshape(1, FD).astype(jnp.float32)
    whp = jnp.pad(wh.astype(jnp.float32), ((0, 0), (0, d_out_pad - d_out)))
    bhp = jnp.pad(bh.astype(jnp.float32).reshape(1, d_out),
                  ((0, 0), (0, d_out_pad - d_out)))

    # MXU operand dtype for the MLP matmuls (bf16 is MXU-native on all
    # generations; accumulation and all biases stay f32).
    w1c = w1.astype(mxu_dtype)
    w2c = w2.astype(mxu_dtype)
    whc = whp.astype(mxu_dtype)

    def const_spec(shape):
        nd = len(shape)
        return pl.BlockSpec(shape, lambda i: (0,) * nd)

    w_itemsize = jnp.dtype(mxu_dtype).itemsize
    flops = 2 * b_pad * (F * FD + FD * H1 + H1 * H2 + H2 * d_out_pad) + 3 * b_pad * FD
    bytes_accessed = (b_pad * F * 4                                     # x tiles
                      + (F * FD + FD) * 4                               # tokenizer Rw / bias
                      + (FD * H1 + H1 * H2 + H2 * d_out_pad) * w_itemsize  # MLP weights
                      + (H1 + H2 + d_out_pad) * 4                       # MLP biases
                      + b_pad * d_out_pad * 4)                          # output

    out = pl.pallas_call(
        flat_model_kernel,
        out_shape=jax.ShapeDtypeStruct((b_pad, d_out_pad), jnp.float32),
        grid_spec=pltpu.PrefetchScalarGridSpec(
            num_scalar_prefetch=0,
            grid=(grid_b,),
            in_specs=[
                pl.BlockSpec((tb, F), lambda i: (i, 0)),    # raw x_num tile
                const_spec((F, FD)),                        # block-diag emb weight
                const_spec((1, FD)),                        # emb bias (flat)
                const_spec((FD, H1)),                       # MLP W1
                const_spec((1, H1)),                        # MLP b1
                const_spec((H1, H2)),                       # MLP W2
                const_spec((1, H2)),                        # MLP b2
                const_spec((H2, d_out_pad)),                # head W (lane-padded)
                const_spec((1, d_out_pad)),                 # head b (lane-padded)
            ],
            out_specs=pl.BlockSpec((tb, d_out_pad), lambda i: (i, 0)),
        ),
        compiler_params=pltpu.CompilerParams(
            dimension_semantics=("parallel",)),
        cost_estimate=pl.CostEstimate(flops=flops, transcendentals=0,
                                      bytes_accessed=bytes_accessed),
    )(x_f32, rw, ebf, w1c, b1, w2c, b2, whc, bhp)
    return out[:B, :d_out]


def flat_model_reference(x_num, params):
    ew, eb, w1, b1, w2, b2, wh, bh = params
    emb = jnp.maximum(x_num[:, :, None] * ew[None] + eb[None], 0.0)   # (B, F, D)
    h = emb.reshape(x_num.shape[0], -1)                               # flatten(1, 2)
    h = jnp.maximum(h @ w1 + b1, 0.0)
    h = jnp.maximum(h @ w2 + b2, 0.0)
    return h @ wh + bh


if __name__ == "__main__":
    B, F, D = 200, 4, 32          # batch (ragged vs tile), n_num_features, d_num_embedding
    H1, H2, d_out = 64, 64, 4     # MLP d_layers and dataset.nn_output_dim

    key = jax.random.PRNGKey(0)
    ks = jax.random.split(key, 9)
    x_num = jax.random.normal(ks[0], (B, F), dtype=jnp.float32)

    # Deterministic parameter init (uniform-ish, matching the module's shapes).
    ew = jax.random.uniform(ks[1], (F, D), jnp.float32, -0.5, 0.5)
    eb = jax.random.uniform(ks[2], (F, D), jnp.float32, -0.5, 0.5)
    w1 = jax.random.uniform(ks[3], (F * D, H1), jnp.float32, -0.1, 0.1)
    b1 = jax.random.uniform(ks[4], (1, H1), jnp.float32, -0.1, 0.1)
    w2 = jax.random.uniform(ks[5], (H1, H2), jnp.float32, -0.1, 0.1)
    b2 = jax.random.uniform(ks[6], (1, H2), jnp.float32, -0.1, 0.1)
    wh = jax.random.uniform(ks[7], (H2, d_out), jnp.float32, -0.1, 0.1)
    bh = jax.random.uniform(ks[8], (1, d_out), jnp.float32, -0.1, 0.1)
    params = (ew, eb, w1, b1, w2, b2, wh, bh)

    ref = jax.block_until_ready(flat_model_reference(x_num, params))

    # f32 MXU-operand path (tight tolerance).
    out_f32 = jax.block_until_ready(
        flat_model_forward(x_num, params, mxu_dtype=jnp.float32))
    assert out_f32.shape == (B, d_out)
    assert np.allclose(np.asarray(out_f32), np.asarray(ref), atol=1e-5, rtol=1e-5)

    # Default bf16 MXU-operand path (MLP matmul operands only; tokenizer and
    # accumulation stay f32) -- looser tolerance.
    out_bf16 = jax.block_until_ready(flat_model_forward(x_num, params))
    assert out_bf16.shape == (B, d_out)
    assert np.allclose(np.asarray(out_bf16), np.asarray(ref), atol=5e-2, rtol=5e-2)

    # TODO(synk): categorical one-hot / CategoricalFeatureTokenizer branch,
    # fourier_features branch, and DICE/periodic/autodis embedding variants of
    # FlatModel are not exercised in this configuration (x_cat=None, MLP arch).
    print("KERNEL_OK")
</pallas_src>

<mosaic_0001>
module attributes {stable_mosaic.version = 11 : i64} {
  func.func @flat_model_kernel(%arg0: i32, %arg1: memref<200x4xf32, #tpu.memory_space<vmem>>, %arg2: memref<4x128xf32, #tpu.memory_space<vmem>>, %arg3: memref<1x128xf32, #tpu.memory_space<vmem>>, %arg4: memref<128x64xf32, #tpu.memory_space<vmem>>, %arg5: memref<1x64xf32, #tpu.memory_space<vmem>>, %arg6: memref<64x64xf32, #tpu.memory_space<vmem>>, %arg7: memref<1x64xf32, #tpu.memory_space<vmem>>, %arg8: memref<64x128xf32, #tpu.memory_space<vmem>>, %arg9: memref<1x128xf32, #tpu.memory_space<vmem>>, %arg10: memref<200x128xf32, #tpu.memory_space<vmem>>) attributes {dimension_semantics = [#tpu.dimension_semantics<parallel>], iteration_bounds = array<i64: 1>, scalar_prefetch = 0 : i64, scratch_operands = 0 : i64, tpu.core_type = #tpu.core_type<tc>, window_params = [{transform_indices = @transform_0, window_bounds = array<i64: 200, 4>}, {pipeline_mode = #tpu.pipeline_mode<synchronous>, transform_indices = @transform_1, window_bounds = array<i64: 4, 128>}, {pipeline_mode = #tpu.pipeline_mode<synchronous>, transform_indices = @transform_2, window_bounds = array<i64: 1, 128>}, {pipeline_mode = #tpu.pipeline_mode<synchronous>, transform_indices = @transform_3, window_bounds = array<i64: 128, 64>}, {pipeline_mode = #tpu.pipeline_mode<synchronous>, transform_indices = @transform_4, window_bounds = array<i64: 1, 64>}, {pipeline_mode = #tpu.pipeline_mode<synchronous>, transform_indices = @transform_5, window_bounds = array<i64: 64, 64>}, {pipeline_mode = #tpu.pipeline_mode<synchronous>, transform_indices = @transform_6, window_bounds = array<i64: 1, 64>}, {pipeline_mode = #tpu.pipeline_mode<synchronous>, transform_indices = @transform_7, window_bounds = array<i64: 64, 128>}, {pipeline_mode = #tpu.pipeline_mode<synchronous>, transform_indices = @transform_8, window_bounds = array<i64: 1, 128>}, {transform_indices = @transform_9, window_bounds = array<i64: 200, 128>}]} {
    %c0 = arith.constant 0 : index
    %c0_0 = arith.constant 0 : index
    %0 = vector.load %arg1[%c0, %c0_0] : memref<200x4xf32, #tpu.memory_space<vmem>>, vector<200x4xf32>
    %c0_1 = arith.constant 0 : index
    %c0_2 = arith.constant 0 : index
    %1 = vector.load %arg2[%c0_1, %c0_2] : memref<4x128xf32, #tpu.memory_space<vmem>>, vector<4x128xf32>
    %cst = arith.constant dense<0.000000e+00> : vector<200x128xf32>
    %2 = tpu.matmul %0, %1, %cst {dimension_numbers = #tpu.dot_dimension_numbers<[1], [0], [0], [1], [0, 0, 1, 1], [], []>} : vector<200x4xf32>, vector<4x128xf32>, vector<200x128xf32> -> vector<200x128xf32>
    %c0_3 = arith.constant 0 : index
    %c0_4 = arith.constant 0 : index
    %3 = vector.load %arg3[%c0_3, %c0_4] : memref<1x128xf32, #tpu.memory_space<vmem>>, vector<1x128xf32>
    %4 = vector.broadcast %3 : vector<1x128xf32> to vector<200x128xf32>
    %5 = arith.addf %2, %4 : vector<200x128xf32>
    %cst_5 = arith.constant 0.000000e+00 : f32
    %6 = vector.broadcast %cst_5 : f32 to vector<200x128xf32>
    %7 = arith.maximumf %5, %6 : vector<200x128xf32>
    %c0_6 = arith.constant 0 : index
    %c0_7 = arith.constant 0 : index
    %8 = vector.load %arg4[%c0_6, %c0_7] : memref<128x64xf32, #tpu.memory_space<vmem>>, vector<128x64xf32>
    %cst_8 = arith.constant dense<0.000000e+00> : vector<200x64xf32>
    %9 = tpu.matmul %7, %8, %cst_8 {dimension_numbers = #tpu.dot_dimension_numbers<[1], [0], [0], [1], [0, 0, 1, 1], [], []>} : vector<200x128xf32>, vector<128x64xf32>, vector<200x64xf32> -> vector<200x64xf32>
    %c0_9 = arith.constant 0 : index
    %c0_10 = arith.constant 0 : index
    %10 = vector.load %arg5[%c0_9, %c0_10] : memref<1x64xf32, #tpu.memory_space<vmem>>, vector<1x64xf32>
    %11 = vector.broadcast %10 : vector<1x64xf32> to vector<200x64xf32>
    %12 = arith.addf %9, %11 : vector<200x64xf32>
    %cst_11 = arith.constant 0.000000e+00 : f32
    %13 = vector.broadcast %cst_11 : f32 to vector<200x64xf32>
    %14 = arith.maximumf %12, %13 : vector<200x64xf32>
    %c0_12 = arith.constant 0 : index
    %c0_13 = arith.constant 0 : index
    %15 = vector.load %arg6[%c0_12, %c0_13] : memref<64x64xf32, #tpu.memory_space<vmem>>, vector<64x64xf32>
    %cst_14 = arith.constant dense<0.000000e+00> : vector<200x64xf32>
    %16 = tpu.matmul %14, %15, %cst_14 {dimension_numbers = #tpu.dot_dimension_numbers<[1], [0], [0], [1], [0, 0, 1, 1], [], []>} : vector<200x64xf32>, vector<64x64xf32>, vector<200x64xf32> -> vector<200x64xf32>
    %c0_15 = arith.constant 0 : index
    %c0_16 = arith.constant 0 : index
    %17 = vector.load %arg7[%c0_15, %c0_16] : memref<1x64xf32, #tpu.memory_space<vmem>>, vector<1x64xf32>
    %18 = vector.broadcast %17 : vector<1x64xf32> to vector<200x64xf32>
    %19 = arith.addf %16, %18 : vector<200x64xf32>
    %cst_17 = arith.constant 0.000000e+00 : f32
    %20 = vector.broadcast %cst_17 : f32 to vector<200x64xf32>
    %21 = arith.maximumf %19, %20 : vector<200x64xf32>
    %c0_18 = arith.constant 0 : index
    %c0_19 = arith.constant 0 : index
    %22 = vector.load %arg8[%c0_18, %c0_19] : memref<64x128xf32, #tpu.memory_space<vmem>>, vector<64x128xf32>
    %cst_20 = arith.constant dense<0.000000e+00> : vector<200x128xf32>
    %23 = tpu.matmul %21, %22, %cst_20 {dimension_numbers = #tpu.dot_dimension_numbers<[1], [0], [0], [1], [0, 0, 1, 1], [], []>} : vector<200x64xf32>, vector<64x128xf32>, vector<200x128xf32> -> vector<200x128xf32>
    %c0_21 = arith.constant 0 : index
    %c0_22 = arith.constant 0 : index
    %24 = vector.load %arg9[%c0_21, %c0_22] : memref<1x128xf32, #tpu.memory_space<vmem>>, vector<1x128xf32>
    %25 = vector.broadcast %24 : vector<1x128xf32> to vector<200x128xf32>
    %26 = arith.addf %23, %25 : vector<200x128xf32>
    %c0_23 = arith.constant 0 : index
    %c0_24 = arith.constant 0 : index
    %27 = vector.load %arg10[%c0_23, %c0_24] : memref<200x128xf32, #tpu.memory_space<vmem>>, vector<200x128xf32>
    tpu.vector_store %arg10[%c0_23, %c0_24], %26 {strides = array<i32>} : memref<200x128xf32, #tpu.memory_space<vmem>>, vector<200x128xf32>,
    return
  }
  func.func @transform_0(%arg0: i32) -> (i32, i32) {
    %c0_i32 = arith.constant 0 : i32
    %c0_i32_0 = arith.constant 0 : i32
    return %arg0, %c0_i32 : i32, i32
  }
  func.func @transform_1(%arg0: i32) -> (i32, i32) {
    %c0_i32 = arith.constant 0 : i32
    %c0_i32_0 = arith.constant 0 : i32
    %c0_i32_1 = arith.constant 0 : i32
    return %c0_i32, %c0_i32_0 : i32, i32
  }
  func.func @transform_2(%arg0: i32) -> (i32, i32) {
    %c0_i32 = arith.constant 0 : i32
    %c0_i32_0 = arith.constant 0 : i32
    %c0_i32_1 = arith.constant 0 : i32
    return %c0_i32, %c0_i32_0 : i32, i32
  }
  func.func @transform_3(%arg0: i32) -> (i32, i32) {
    %c0_i32 = arith.constant 0 : i32
    %c0_i32_0 = arith.constant 0 : i32
    %c0_i32_1 = arith.constant 0 : i32
    return %c0_i32, %c0_i32_0 : i32, i32
  }
  func.func @transform_4(%arg0: i32) -> (i32, i32) {
    %c0_i32 = arith.constant 0 : i32
    %c0_i32_0 = arith.constant 0 : i32
    %c0_i32_1 = arith.constant 0 : i32
    return %c0_i32, %c0_i32_0 : i32, i32
  }
  func.func @transform_5(%arg0: i32) -> (i32, i32) {
    %c0_i32 = arith.constant 0 : i32
    %c0_i32_0 = arith.constant 0 : i32
    %c0_i32_1 = arith.constant 0 : i32
    return %c0_i32, %c0_i32_0 : i32, i32
  }
  func.func @transform_6(%arg0: i32) -> (i32, i32) {
    %c0_i32 = arith.constant 0 : i32
    %c0_i32_0 = arith.constant 0 : i32
    %c0_i32_1 = arith.constant 0 : i32
    return %c0_i32, %c0_i32_0 : i32, i32
  }
  func.func @transform_7(%arg0: i32) -> (i32, i32) {
    %c0_i32 = arith.constant 0 : i32
    %c0_i32_0 = arith.constant 0 : i32
    %c0_i32_1 = arith.constant 0 : i32
    return %c0_i32, %c0_i32_0 : i32, i32
  }
  func.func @transform_8(%arg0: i32) -> (i32, i32) {
    %c0_i32 = arith.constant 0 : i32
    %c0_i32_0 = arith.constant 0 : i32
    %c0_i32_1 = arith.constant 0 : i32
    return %c0_i32, %c0_i32_0 : i32, i32
  }
  func.func @transform_9(%arg0: i32) -> (i32, i32) {
    %c0_i32 = arith.constant 0 : i32
    %c0_i32_0 = arith.constant 0 : i32
    return %arg0, %c0_i32 : i32, i32
  }
}

</mosaic_0001>

<llo_original>
// kernel: tpu_custom_call.1
$region0: #{tpu_custom_call.1}
  #allocation0 [shape = 'u32[]', space=smem, size = 0x4, offset = 0x4, fixed_abs, tag = 'smem constant byte address 0x4 - core index']
  #allocation1 [shape = 'u32[144,128]{1,0:T(1,128)}', space=vmem, size = 0x12000, scoped, tag = 'internal scratch']
  %s0 = inlined_call_operand.vmem [shape: f32[200,4], index: 0, kind: input, shape index: {}]
  %s1 = inlined_call_operand.vmem [shape: f32[4,128], index: 1, kind: input, shape index: {}]
  %s2 = inlined_call_operand.vmem [shape: f32[1,128], index: 2, kind: input, shape index: {}]
  %s3 = inlined_call_operand.vmem [shape: f32[128,64], index: 3, kind: input, shape index: {}]
  %s4 = inlined_call_operand.vmem [shape: f32[1,64], index: 4, kind: input, shape index: {}]
  %s5 = inlined_call_operand.vmem [shape: f32[64,64], index: 5, kind: input, shape index: {}]
  %s6 = inlined_call_operand.vmem [shape: f32[1,64], index: 6, kind: input, shape index: {}]
  %s7 = inlined_call_operand.vmem [shape: f32[64,128], index: 7, kind: input, shape index: {}]
  %s8 = inlined_call_operand.vmem [shape: f32[1,128], index: 8, kind: input, shape index: {}]
  %s9 = inlined_call_operand.hbm [shape: f32[200,128], index: 9, kind: output, shape index: {}]
  %s10 = sld [smem:[#allocation0]]
  $region46: #{tpu_custom_call.1} parent=0
    _
  %s12 = ssub.s32 1, %s10
  %s13 = scalar_select 0, %s12, %s10
  $region1: #{tpu_custom_call.1} parent=0
    #allocation2 [shape = 'u8[102400]{0}', space=vmem, size = 0x19000, scoped, tag = 'output window, operand 0, single buffered']
    #allocation3 [shape = 's32[1]{0}', space=sflag, size = 0x4, scoped, tag = 'scoped memory for tpu_custom_call.1']
    %14 = vsyncpa [#allocation3], 0
    // Predicated region
    $region2: #{tpu_custom_call.1} parent=1 // pred_check
      _
    $region3: #{tpu_custom_call.1} parent=1 // pred_check_branch
      %16 = sbr.rel (0) target = $region5
    $region4: #{tpu_custom_call.1} parent=1 // pred_region
      _
    $region5: #{tpu_custom_call.1} parent=1 // pred_fallthru
      _
    // Predicated region
    $region6: #{tpu_custom_call.1} parent=1 // pred_check
      _
    $region7: #{tpu_custom_call.1} parent=1 // pred_check_branch
      %18 = sbr.rel (0) target = $region9
    $region8: #{tpu_custom_call.1} parent=1 // pred_region
      _
    $region9: #{tpu_custom_call.1} parent=1 // pred_fallthru
      _
    // Predicated region
    $region10: #{tpu_custom_call.1} parent=1 // pred_check
      _
    $region11: #{tpu_custom_call.1} parent=1 // pred_check_branch
      %20 = sbr.rel (0) target = $region13
    $region12: #{tpu_custom_call.1} parent=1 // pred_region
      _
    $region13: #{tpu_custom_call.1} parent=1 // pred_fallthru
      _
    // Predicated region
    $region14: #{tpu_custom_call.1} parent=1 // pred_check
      _
    $region15: #{tpu_custom_call.1} parent=1 // pred_check_branch
      %22 = sbr.rel (0) target = $region17
    $region16: #{tpu_custom_call.1} parent=1 // pred_region
      _
    $region17: #{tpu_custom_call.1} parent=1 // pred_fallthru
      _
    // Predicated region
    $region18: #{tpu_custom_call.1} parent=1 // pred_check
      _
    $region19: #{tpu_custom_call.1} parent=1 // pred_check_branch
      %24 = sbr.rel (0) target = $region21
    $region20: #{tpu_custom_call.1} parent=1 // pred_region
      _
    $region21: #{tpu_custom_call.1} parent=1 // pred_fallthru
      _
    // Predicated region
    $region22: #{tpu_custom_call.1} parent=1 // pred_check
      _
    $region23: #{tpu_custom_call.1} parent=1 // pred_check_branch
      %26 = sbr.rel (0) target = $region25
    $region24: #{tpu_custom_call.1} parent=1 // pred_region
      _
    $region25: #{tpu_custom_call.1} parent=1 // pred_fallthru
      _
    // Predicated region
    $region26: #{tpu_custom_call.1} parent=1 // pred_check
      _
    $region27: #{tpu_custom_call.1} parent=1 // pred_check_branch
      %28 = sbr.rel (0) target = $region29
    $region28: #{tpu_custom_call.1} parent=1 // pred_region
      _
    $region29: #{tpu_custom_call.1} parent=1 // pred_fallthru
      _
    // Predicated region
    $region30: #{tpu_custom_call.1} parent=1 // pred_check
      _
    $region31: #{tpu_custom_call.1} parent=1 // pred_check_branch
      %30 = sbr.rel (0) target = $region33
    $region32: #{tpu_custom_call.1} parent=1 // pred_region
      _
    $region33: #{tpu_custom_call.1} parent=1 // pred_fallthru
      _
    // Predicated region
    $region34: #{tpu_custom_call.1} parent=1 // pred_check
      _
    $region35: #{tpu_custom_call.1} parent=1 // pred_check_branch
      %32 = sbr.rel (0) target = $region37
    $region36: #{tpu_custom_call.1} parent=1 // pred_region
      _
    $region37: #{tpu_custom_call.1} parent=1 // pred_fallthru
      _
    %v33 = vld [vmem:[%s0] sm:$0xff]
    %v34 = vld [vmem:[%s0 + $0x8] sm:$0xff]
    %v35 = vld [vmem:[%s0 + $0x10] sm:$0xff]
    %v36 = vld [vmem:[%s0 + $0x18] sm:$0xff]
    %v37 = vld [vmem:[%s0 + $0x20] sm:$0xff]
    %v38 = vld [vmem:[%s0 + $0x28] sm:$0xff]
    %v39 = vld [vmem:[%s0 + $0x30] sm:$0xff]
    %v40 = vld [vmem:[%s0 + $0x38] sm:$0xff]
    %v41 = vld [vmem:[%s0 + $0x40] sm:$0xff]
    %v42 = vld [vmem:[%s0 + $0x48] sm:$0xff]
    %v43 = vld [vmem:[%s0 + $0x50] sm:$0xff]
    %v44 = vld [vmem:[%s0 + $0x58] sm:$0xff]
    %v45 = vld [vmem:[%s0 + $0x60] sm:$0xff]
    %v46 = vld [vmem:[%s0 + $0x68] sm:$0xff]
    %v47 = vld [vmem:[%s0 + $0x70] sm:$0xff]
    %v48 = vld [vmem:[%s0 + $0x78] sm:$0xff]
    %v49 = vld [vmem:[%s0 + $0x80] sm:$0xff]
    %v50 = vld [vmem:[%s0 + $0x88] sm:$0xff]
    %v51 = vld [vmem:[%s0 + $0x90] sm:$0xff]
    %v52 = vld [vmem:[%s0 + $0x98] sm:$0xff]
    %v53 = vld [vmem:[%s0 + $0xa0] sm:$0xff]
    %v54 = vld [vmem:[%s0 + $0xa8] sm:$0xff]
    %v55 = vld [vmem:[%s0 + $0xb0] sm:$0xff]
    %v56 = vld [vmem:[%s0 + $0xb8] sm:$0xff]
    %v57 = vld [vmem:[%s0 + $0xc0] sm:$0xff]
    %v58 = vld [vmem:[%s1] sm:$0xf]
    %v59 = vld [vmem:[%s2] sm:$0x1]
    %v61 = vlaneseq
    %v62 = vshrl.u32 %v61, 7
    %v63 = vsub.s32 0, %v62
    %v64 = vrot.slane %v59, %v63
    %vm66 = vcmask 31744
    %v68 = vsel %vm66, %v33, 0
    %v71 = vsel %vm66, %v34, 0
    %v74 = vsel %vm66, %v35, 0
    %v77 = vsel %vm66, %v36, 0
    %v80 = vsel %vm66, %v37, 0
    %v83 = vsel %vm66, %v38, 0
    %v86 = vsel %vm66, %v39, 0
    %v89 = vsel %vm66, %v40, 0
    %v92 = vsel %vm66, %v41, 0
    %v95 = vsel %vm66, %v42, 0
    %v98 = vsel %vm66, %v43, 0
    %v101 = vsel %vm66, %v44, 0
    %v104 = vsel %vm66, %v45, 0
    %v107 = vsel %vm66, %v46, 0
    %v110 = vsel %vm66, %v47, 0
    %v113 = vsel %vm66, %v48, 0
    %v116 = vsel %vm66, %v49, 0
    %v119 = vsel %vm66, %v50, 0
    %v122 = vsel %vm66, %v51, 0
    %v125 = vsel %vm66, %v52, 0
    %v128 = vsel %vm66, %v53, 0
    %v131 = vsel %vm66, %v54, 0
    %v134 = vsel %vm66, %v55, 0
    %v137 = vsel %vm66, %v56, 0
    %v140 = vsel %vm66, %v57, 0
    %vm142 = vcmask 1043456
    %v144 = vsel %vm142, %v58, 0
    %146 = vmatprep.subr.mxu0 0.0
    %147 = vmatpush1.msra.mxu0 0.0
    %148 = vmatprep.subr.mxu0 0.0
    %149 = vmatpush1.msra.mxu0 0.0
    %150 = vmatprep.subr.mxu0 0.0
    %151 = vmatpush1.msra.mxu0 0.0
    %152 = vmatprep.subr.mxu0 0.0
    %153 = vmatpush1.msra.mxu0 0.0
    %154 = vmatprep.subr.mxu0 0.0
    %155 = vmatpush1.msra.mxu0 0.0
    %156 = vmatprep.subr.mxu0 0.0
    %157 = vmatpush1.msra.mxu0 0.0
    %158 = vmatprep.subr.mxu0 0.0
    %159 = vmatpush1.msra.mxu0 0.0
    %160 = vmatprep.subr.mxu0 0.0
    %161 = vmatpush1.msra.mxu0 0.0
    %162 = vmatprep.subr.mxu0 0.0
    %163 = vmatpush1.msra.mxu0 0.0
    %164 = vmatprep.subr.mxu0 0.0
    %165 = vmatpush1.msra.mxu0 0.0
    %166 = vmatprep.subr.mxu0 0.0
    %167 = vmatpush1.msra.mxu0 0.0
    %168 = vmatprep.subr.mxu0 0.0
    %169 = vmatpush1.msra.mxu0 0.0
    %170 = vmatprep.subr.mxu0 0.0
    %171 = vmatpush1.msra.mxu0 0.0
    %172 = vmatprep.subr.mxu0 0.0
    %173 = vmatpush1.msra.mxu0 0.0
    %174 = vmatprep.subr.mxu0 0.0
    %175 = vmatpush1.msra.mxu0 0.0
    %176 = vmatprep.subr.mxu0 0.0
    %177 = vmatpush1.msra.mxu0 %v144
    %178 = vmatprep.subr.mxu0 0.0
    %179 = vmatpush2.msra.mxu0 0.0
    %180 = vmatprep.subr.mxu0 0.0
    %181 = vmatpush2.msra.mxu0 0.0
    %182 = vmatprep.subr.mxu0 0.0
    %183 = vmatpush2.msra.mxu0 0.0
    %184 = vmatprep.subr.mxu0 0.0
    %185 = vmatpush2.msra.mxu0 0.0
    %186 = vmatprep.subr.mxu0 0.0
    %187 = vmatpush2.msra.mxu0 0.0
    %188 = vmatprep.subr.mxu0 0.0
    %189 = vmatpush2.msra.mxu0 0.0
    %190 = vmatprep.subr.mxu0 0.0
    %191 = vmatpush2.msra.mxu0 0.0
    %192 = vmatprep.subr.mxu0 0.0
    %193 = vmatpush2.msra.mxu0 0.0
    %194 = vmatprep.subr.mxu0 0.0
    %195 = vmatpush2.msra.mxu0 0.0
    %196 = vmatprep.subr.mxu0 0.0
    %197 = vmatpush2.msra.mxu0 0.0
    %198 = vmatprep.subr.mxu0 0.0
    %199 = vmatpush2.msra.mxu0 0.0
    %200 = vmatprep.subr.mxu0 0.0
    %201 = vmatpush2.msra.mxu0 0.0
    %202 = vmatprep.subr.mxu0 0.0
    %203 = vmatpush2.msra.mxu0 0.0
    %204 = vmatprep.subr.mxu0 0.0
    %205 = vmatpush2.msra.mxu0 0.0
    %206 = vmatprep.subr.mxu0 0.0
    %207 = vmatpush2.msra.mxu0 0.0
    %208 = vmatprep.subr.mxu0 0.0
    %209 = vmatpush2.msra.mxu0 0.0
    %210 = vmatprep.mubr.f32.mxu0 0.0
    %211 = vmatmul.mubr.f32.gmra.mxu0 %v68
    %v212 = vpop.f32.mrf.mxu0
    %v213 = vadd.f32 %v64, %v212
    %v214 = vpop.f32.mrf.mxu0
    %215 = vmatprep.mubr.f32.mxu0 0.0
    %216 = vmatmul.mubr.f32.gmra.mxu0 %v71
    %v217 = vpop.f32.mrf.mxu0
    %v218 = vadd.f32 %v64, %v217
    %v219 = vpop.f32.mrf.mxu0
    %220 = vmatprep.mubr.f32.mxu0 0.0
    %221 = vmatmul.mubr.f32.gmra.mxu0 %v74
    %v222 = vpop.f32.mrf.mxu0
    %v223 = vadd.f32 %v64, %v222
    %v224 = vpop.f32.mrf.mxu0
    %225 = vmatprep.mubr.f32.mxu0 0.0
    %226 = vmatmul.mubr.f32.gmra.mxu0 %v77
    %v227 = vpop.f32.mrf.mxu0
    %v228 = vadd.f32 %v64, %v227
    %v229 = vpop.f32.mrf.mxu0
    %230 = vmatprep.mubr.f32.mxu0 0.0
    %231 = vmatmul.mubr.f32.gmra.mxu0 %v80
    %v232 = vpop.f32.mrf.mxu0
    %v233 = vadd.f32 %v64, %v232
    %v234 = vpop.f32.mrf.mxu0
    %235 = vmatprep.mubr.f32.mxu0 0.0
    %236 = vmatmul.mubr.f32.gmra.mxu0 %v83
    %v237 = vpop.f32.mrf.mxu0
    %v238 = vadd.f32 %v64, %v237
    %v239 = vpop.f32.mrf.mxu0
    %240 = vmatprep.mubr.f32.mxu0 0.0
    %241 = vmatmul.mubr.f32.gmra.mxu0 %v86
    %v242 = vpop.f32.mrf.mxu0
    %v243 = vadd.f32 %v64, %v242
    %v244 = vpop.f32.mrf.mxu0
    %245 = vmatprep.mubr.f32.mxu0 0.0
    %246 = vmatmul.mubr.f32.gmra.mxu0 %v89
    %v247 = vpop.f32.mrf.mxu0
    %v248 = vadd.f32 %v64, %v247
    %v249 = vpop.f32.mrf.mxu0
    %250 = vmatprep.mubr.f32.mxu0 0.0
    %251 = vmatmul.mubr.f32.gmra.mxu0 %v92
    %v252 = vpop.f32.mrf.mxu0
    %v253 = vadd.f32 %v64, %v252
    %v254 = vpop.f32.mrf.mxu0
    %255 = vmatprep.mubr.f32.mxu0 0.0
    %256 = vmatmul.mubr.f32.gmra.mxu0 %v95
    %v257 = vpop.f32.mrf.mxu0
    %v258 = vadd.f32 %v64, %v257
    %v259 = vpop.f32.mrf.mxu0
    %260 = vmatprep.mubr.f32.mxu0 0.0
    %261 = vmatmul.mubr.f32.gmra.mxu0 %v98
    %v262 = vpop.f32.mrf.mxu0
    %v263 = vadd.f32 %v64, %v262
    %v264 = vpop.f32.mrf.mxu0
    %265 = vmatprep.mubr.f32.mxu0 0.0
    %266 = vmatmul.mubr.f32.gmra.mxu0 %v101
    %v267 = vpop.f32.mrf.mxu0
    %v268 = vadd.f32 %v64, %v267
    %v269 = vpop.f32.mrf.mxu0
    %270 = vmatprep.mubr.f32.mxu0 0.0
    %271 = vmatmul.mubr.f32.gmra.mxu0 %v104
    %v272 = vpop.f32.mrf.mxu0
    %v273 = vadd.f32 %v64, %v272
    %v274 = vpop.f32.mrf.mxu0
    %275 = vmatprep.mubr.f32.mxu0 0.0
    %276 = vmatmul.mubr.f32.gmra.mxu0 %v107
    %v277 = vpop.f32.mrf.mxu0
    %v278 = vadd.f32 %v64, %v277
    %v279 = vpop.f32.mrf.mxu0
    %280 = vmatprep.mubr.f32.mxu0 0.0
    %281 = vmatmul.mubr.f32.gmra.mxu0 %v110
    %v282 = vpop.f32.mrf.mxu0
    %v283 = vadd.f32 %v64, %v282
    %v284 = vpop.f32.mrf.mxu0
    %285 = vmatprep.mubr.f32.mxu0 0.0
    %286 = vmatmul.mubr.f32.gmra.mxu0 %v113
    %v287 = vpop.f32.mrf.mxu0
    %v288 = vadd.f32 %v64, %v287
    %v289 = vpop.f32.mrf.mxu0
    %290 = vmatprep.mubr.f32.mxu0 0.0
    %291 = vmatmul.mubr.f32.gmra.mxu0 %v116
    %v292 = vpop.f32.mrf.mxu0
    %v293 = vadd.f32 %v64, %v292
    %v294 = vpop.f32.mrf.mxu0
    %295 = vmatprep.mubr.f32.mxu0 0.0
    %296 = vmatmul.mubr.f32.gmra.mxu0 %v119
    %v297 = vpop.f32.mrf.mxu0
    %v298 = vadd.f32 %v64, %v297
    %v299 = vpop.f32.mrf.mxu0
    %300 = vmatprep.mubr.f32.mxu0 0.0
    %301 = vmatmul.mubr.f32.gmra.mxu0 %v122
    %v302 = vpop.f32.mrf.mxu0
    %v303 = vadd.f32 %v64, %v302
    %v304 = vpop.f32.mrf.mxu0
    %305 = vmatprep.mubr.f32.mxu0 0.0
    %306 = vmatmul.mubr.f32.gmra.mxu0 %v125
    %v307 = vpop.f32.mrf.mxu0
    %v308 = vadd.f32 %v64, %v307
    %v309 = vpop.f32.mrf.mxu0
    %310 = vmatprep.mubr.f32.mxu0 0.0
    %311 = vmatmul.mubr.f32.gmra.mxu0 %v128
    %v312 = vpop.f32.mrf.mxu0
    %v313 = vadd.f32 %v64, %v312
    %v314 = vpop.f32.mrf.mxu0
    %315 = vmatprep.mubr.f32.mxu0 0.0
    %316 = vmatmul.mubr.f32.gmra.mxu0 %v131
    %v317 = vpop.f32.mrf.mxu0
    %v318 = vadd.f32 %v64, %v317
    %v319 = vpop.f32.mrf.mxu0
    %320 = vmatprep.mubr.f32.mxu0 0.0
    %321 = vmatmul.mubr.f32.gmra.mxu0 %v134
    %v322 = vpop.f32.mrf.mxu0
    %v323 = vadd.f32 %v64, %v322
    %v324 = vpop.f32.mrf.mxu0
    %325 = vmatprep.mubr.f32.mxu0 0.0
    %326 = vmatmul.mubr.f32.gmra.mxu0 %v137
    %v327 = vpop.f32.mrf.mxu0
    %v328 = vadd.f32 %v64, %v327
    %v329 = vpop.f32.mrf.mxu0
    %330 = vmatprep.mubr.f32.mxu0 0.0
    %331 = vmatmul.mubr.f32.gmra.mxu0 %v140
    %v332 = vpop.f32.mrf.mxu0
    %v333 = vadd.f32 %v64, %v332
    %v334 = vpop.f32.mrf.mxu0
    %335 = vdwg.mxu0
    %v336 = vmax.f32 %v213, 0.0
    %v337 = vmax.f32 %v218, 0.0
    %v338 = vmax.f32 %v223, 0.0
    %v339 = vmax.f32 %v228, 0.0
    %v340 = vmax.f32 %v233, 0.0
    %v341 = vmax.f32 %v238, 0.0
    %v342 = vmax.f32 %v243, 0.0
    %v343 = vmax.f32 %v248, 0.0
    %v344 = vmax.f32 %v253, 0.0
    %v345 = vmax.f32 %v258, 0.0
    %v346 = vmax.f32 %v263, 0.0
    %v347 = vmax.f32 %v268, 0.0
    %v348 = vmax.f32 %v273, 0.0
    %v349 = vmax.f32 %v278, 0.0
    %v350 = vmax.f32 %v283, 0.0
    %v351 = vmax.f32 %v288, 0.0
    %v352 = vmax.f32 %v293, 0.0
    %v353 = vmax.f32 %v298, 0.0
    %v354 = vmax.f32 %v303, 0.0
    %v355 = vmax.f32 %v308, 0.0
    %v356 = vmax.f32 %v313, 0.0
    %v357 = vmax.f32 %v318, 0.0
    %v358 = vmax.f32 %v323, 0.0
    %v359 = vmax.f32 %v328, 0.0
    %v360 = vmax.f32 %v333, 0.0
    %v361 = vld [vmem:[%s3] sm:$0xff]
    %v362 = vld [vmem:[%s3 + $0x8] sm:$0xff]
    %v363 = vld [vmem:[%s3 + $0x10] sm:$0xff]
    %v364 = vld [vmem:[%s3 + $0x18] sm:$0xff]
    %v365 = vld [vmem:[%s3 + $0x20] sm:$0xff]
    %v366 = vld [vmem:[%s3 + $0x28] sm:$0xff]
    %v367 = vld [vmem:[%s3 + $0x30] sm:$0xff]
    %v368 = vld [vmem:[%s3 + $0x38] sm:$0xff]
    %v369 = vld [vmem:[%s3 + $0x40] sm:$0xff]
    %v370 = vld [vmem:[%s3 + $0x48] sm:$0xff]
    %v371 = vld [vmem:[%s3 + $0x50] sm:$0xff]
    %v372 = vld [vmem:[%s3 + $0x58] sm:$0xff]
    %v373 = vld [vmem:[%s3 + $0x60] sm:$0xff]
    %v374 = vld [vmem:[%s3 + $0x68] sm:$0xff]
    %v375 = vld [vmem:[%s3 + $0x70] sm:$0xff]
    %v376 = vld [vmem:[%s3 + $0x78] sm:$0xff]
    %v377 = vld [vmem:[%s4] sm:$0x1]
    %v379 = vlaneseq
    %v380 = vshrl.u32 %v379, 7
    %v381 = vsub.s32 0, %v380
    %v382 = vrot.slane %v377, %v381
    %384 = vmatprep.subr.mxu0 0.0
    %385 = vmatpush1.msra.mxu0 %v376
    %386 = vmatprep.subr.mxu0 0.0
    %387 = vmatpush1.msra.mxu0 %v375
    %388 = vmatprep.subr.mxu0 0.0
    %389 = vmatpush1.msra.mxu0 %v374
    %390 = vmatprep.subr.mxu0 0.0
    %391 = vmatpush1.msra.mxu0 %v373
    %392 = vmatprep.subr.mxu0 0.0
    %393 = vmatpush1.msra.mxu0 %v372
    %394 = vmatprep.subr.mxu0 0.0
    %395 = vmatpush1.msra.mxu0 %v371
    %396 = vmatprep.subr.mxu0 0.0
    %397 = vmatpush1.msra.mxu0 %v370
    %398 = vmatprep.subr.mxu0 0.0
    %399 = vmatpush1.msra.mxu0 %v369
    %400 = vmatprep.subr.mxu0 0.0
    %401 = vmatpush1.msra.mxu0 %v368
    %402 = vmatprep.subr.mxu0 0.0
    %403 = vmatpush1.msra.mxu0 %v367
    %404 = vmatprep.subr.mxu0 0.0
    %405 = vmatpush1.msra.mxu0 %v366
    %406 = vmatprep.subr.mxu0 0.0
    %407 = vmatpush1.msra.mxu0 %v365
    %408 = vmatprep.subr.mxu0 0.0
    %409 = vmatpush1.msra.mxu0 %v364
    %410 = vmatprep.subr.mxu0 0.0
    %411 = vmatpush1.msra.mxu0 %v363
    %412 = vmatprep.subr.mxu0 0.0
    %413 = vmatpush1.msra.mxu0 %v362
    %414 = vmatprep.subr.mxu0 0.0
    %415 = vmatpush1.msra.mxu0 %v361
    %416 = vmatprep.subr.mxu0 0.0
    %417 = vmatpush2.msra.mxu0 0.0
    %418 = vmatprep.subr.mxu0 0.0
    %419 = vmatpush2.msra.mxu0 0.0
    %420 = vmatprep.subr.mxu0 0.0
    %421 = vmatpush2.msra.mxu0 0.0
    %422 = vmatprep.subr.mxu0 0.0
    %423 = vmatpush2.msra.mxu0 0.0
    %424 = vmatprep.subr.mxu0 0.0
    %425 = vmatpush2.msra.mxu0 0.0
    %426 = vmatprep.subr.mxu0 0.0
    %427 = vmatpush2.msra.mxu0 0.0
    %428 = vmatprep.subr.mxu0 0.0
    %429 = vmatpush2.msra.mxu0 0.0
    %430 = vmatprep.subr.mxu0 0.0
    %431 = vmatpush2.msra.mxu0 0.0
    %432 = vmatprep.subr.mxu0 0.0
    %433 = vmatpush2.msra.mxu0 0.0
    %434 = vmatprep.subr.mxu0 0.0
    %435 = vmatpush2.msra.mxu0 0.0
    %436 = vmatprep.subr.mxu0 0.0
    %437 = vmatpush2.msra.mxu0 0.0
    %438 = vmatprep.subr.mxu0 0.0
    %439 = vmatpush2.msra.mxu0 0.0
    %440 = vmatprep.subr.mxu0 0.0
    %441 = vmatpush2.msra.mxu0 0.0
    %442 = vmatprep.subr.mxu0 0.0
    %443 = vmatpush2.msra.mxu0 0.0
    %444 = vmatprep.subr.mxu0 0.0
    %445 = vmatpush2.msra.mxu0 0.0
    %446 = vmatprep.subr.mxu0 0.0
    %447 = vmatpush2.msra.mxu0 0.0
    %448 = vmatprep.mubr.f32.mxu0 0.0
    %449 = vmatmul.mubr.f32.gmra.mxu0 %v336
    %v450 = vpop.f32.mrf.mxu0
    %v451 = vadd.f32 %v382, %v450
    %v452 = vpop.f32.mrf.mxu0
    %453 = vmatprep.mubr.f32.mxu0 0.0
    %454 = vmatmul.mubr.f32.gmra.mxu0 %v337
    %v455 = vpop.f32.mrf.mxu0
    %v456 = vadd.f32 %v382, %v455
    %v457 = vpop.f32.mrf.mxu0
    %458 = vmatprep.mubr.f32.mxu0 0.0
    %459 = vmatmul.mubr.f32.gmra.mxu0 %v338
    %v460 = vpop.f32.mrf.mxu0
    %v461 = vadd.f32 %v382, %v460
    %v462 = vpop.f32.mrf.mxu0
    %463 = vmatprep.mubr.f32.mxu0 0.0
    %464 = vmatmul.mubr.f32.gmra.mxu0 %v339
    %v465 = vpop.f32.mrf.mxu0
    %v466 = vadd.f32 %v382, %v465
    %v467 = vpop.f32.mrf.mxu0
    %468 = vmatprep.mubr.f32.mxu0 0.0
    %469 = vmatmul.mubr.f32.gmra.mxu0 %v340
    %v470 = vpop.f32.mrf.mxu0
    %v471 = vadd.f32 %v382, %v470
    %v472 = vpop.f32.mrf.mxu0
    %473 = vmatprep.mubr.f32.mxu0 0.0
    %474 = vmatmul.mubr.f32.gmra.mxu0 %v341
    %v475 = vpop.f32.mrf.mxu0
    %v476 = vadd.f32 %v382, %v475
    %v477 = vpop.f32.mrf.mxu0
    %478 = vmatprep.mubr.f32.mxu0 0.0
    %479 = vmatmul.mubr.f32.gmra.mxu0 %v342
    %v480 = vpop.f32.mrf.mxu0
    %v481 = vadd.f32 %v382, %v480
    %v482 = vpop.f32.mrf.mxu0
    %483 = vmatprep.mubr.f32.mxu0 0.0
    %484 = vmatmul.mubr.f32.gmra.mxu0 %v343
    %v485 = vpop.f32.mrf.mxu0
    %v486 = vadd.f32 %v382, %v485
    %v487 = vpop.f32.mrf.mxu0
    %488 = vmatprep.mubr.f32.mxu0 0.0
    %489 = vmatmul.mubr.f32.gmra.mxu0 %v344
    %v490 = vpop.f32.mrf.mxu0
    %v491 = vadd.f32 %v382, %v490
    %v492 = vpop.f32.mrf.mxu0
    %493 = vmatprep.mubr.f32.mxu0 0.0
    %494 = vmatmul.mubr.f32.gmra.mxu0 %v345
    %v495 = vpop.f32.mrf.mxu0
    %v496 = vadd.f32 %v382, %v495
    %v497 = vpop.f32.mrf.mxu0
    %498 = vmatprep.mubr.f32.mxu0 0.0
    %499 = vmatmul.mubr.f32.gmra.mxu0 %v346
    %v500 = vpop.f32.mrf.mxu0
    %v501 = vadd.f32 %v382, %v500
    %v502 = vpop.f32.mrf.mxu0
    %503 = vmatprep.mubr.f32.mxu0 0.0
    %504 = vmatmul.mubr.f32.gmra.mxu0 %v347
    %v505 = vpop.f32.mrf.mxu0
    %v506 = vadd.f32 %v382, %v505
    %v507 = vpop.f32.mrf.mxu0
    %508 = vmatprep.mubr.f32.mxu0 0.0
    %509 = vmatmul.mubr.f32.gmra.mxu0 %v348
    %v510 = vpop.f32.mrf.mxu0
    %v511 = vadd.f32 %v382, %v510
    %v512 = vpop.f32.mrf.mxu0
    %513 = vmatprep.mubr.f32.mxu0 0.0
    %514 = vmatmul.mubr.f32.gmra.mxu0 %v349
    %v515 = vpop.f32.mrf.mxu0
    %v516 = vadd.f32 %v382, %v515
    %v517 = vpop.f32.mrf.mxu0
    %518 = vmatprep.mubr.f32.mxu0 0.0
    %519 = vmatmul.mubr.f32.gmra.mxu0 %v350
    %v520 = vpop.f32.mrf.mxu0
    %v521 = vadd.f32 %v382, %v520
    %v522 = vpop.f32.mrf.mxu0
    %523 = vmatprep.mubr.f32.mxu0 0.0
    %524 = vmatmul.mubr.f32.gmra.mxu0 %v351
    %v525 = vpop.f32.mrf.mxu0
    %v526 = vadd.f32 %v382, %v525
    %v527 = vpop.f32.mrf.mxu0
    %528 = vmatprep.mubr.f32.mxu0 0.0
    %529 = vmatmul.mubr.f32.gmra.mxu0 %v352
    %v530 = vpop.f32.mrf.mxu0
    %v531 = vadd.f32 %v382, %v530
    %v532 = vpop.f32.mrf.mxu0
    %533 = vmatprep.mubr.f32.mxu0 0.0
    %534 = vmatmul.mubr.f32.gmra.mxu0 %v353
    %v535 = vpop.f32.mrf.mxu0
    %v536 = vadd.f32 %v382, %v535
    %v537 = vpop.f32.mrf.mxu0
    %538 = vmatprep.mubr.f32.mxu0 0.0
    %539 = vmatmul.mubr.f32.gmra.mxu0 %v354
    %v540 = vpop.f32.mrf.mxu0
    %v541 = vadd.f32 %v382, %v540
    %v542 = vpop.f32.mrf.mxu0
    %543 = vmatprep.mubr.f32.mxu0 0.0
    %544 = vmatmul.mubr.f32.gmra.mxu0 %v355
    %v545 = vpop.f32.mrf.mxu0
    %v546 = vadd.f32 %v382, %v545
    %v547 = vpop.f32.mrf.mxu0
    %548 = vmatprep.mubr.f32.mxu0 0.0
    %549 = vmatmul.mubr.f32.gmra.mxu0 %v356
    %v550 = vpop.f32.mrf.mxu0
    %v551 = vadd.f32 %v382, %v550
    %v552 = vpop.f32.mrf.mxu0
    %553 = vmatprep.mubr.f32.mxu0 0.0
    %554 = vmatmul.mubr.f32.gmra.mxu0 %v357
    %v555 = vpop.f32.mrf.mxu0
    %v556 = vadd.f32 %v382, %v555
    %v557 = vpop.f32.mrf.mxu0
    %558 = vmatprep.mubr.f32.mxu0 0.0
    %559 = vmatmul.mubr.f32.gmra.mxu0 %v358
    %v560 = vpop.f32.mrf.mxu0
    %v561 = vadd.f32 %v382, %v560
    %v562 = vpop.f32.mrf.mxu0
    %563 = vmatprep.mubr.f32.mxu0 0.0
    %564 = vmatmul.mubr.f32.gmra.mxu0 %v359
    %v565 = vpop.f32.mrf.mxu0
    %v566 = vadd.f32 %v382, %v565
    %v567 = vpop.f32.mrf.mxu0
    %568 = vmatprep.mubr.f32.mxu0 0.0
    %569 = vmatmul.mubr.f32.gmra.mxu0 %v360
    %v570 = vpop.f32.mrf.mxu0
    %v571 = vadd.f32 %v382, %v570
    %v572 = vpop.f32.mrf.mxu0
    %573 = vdwg.mxu0
    %v574 = vmax.f32 %v451, 0.0
    %v575 = vmax.f32 %v456, 0.0
    %v576 = vmax.f32 %v461, 0.0
    %v577 = vmax.f32 %v466, 0.0
    %v578 = vmax.f32 %v471, 0.0
    %v579 = vmax.f32 %v476, 0.0
    %v580 = vmax.f32 %v481, 0.0
    %v581 = vmax.f32 %v486, 0.0
    %v582 = vmax.f32 %v491, 0.0
    %v583 = vmax.f32 %v496, 0.0
    %v584 = vmax.f32 %v501, 0.0
    %v585 = vmax.f32 %v506, 0.0
    %v586 = vmax.f32 %v511, 0.0
    %v587 = vmax.f32 %v516, 0.0
    %v588 = vmax.f32 %v521, 0.0
    %v589 = vmax.f32 %v526, 0.0
    %v590 = vmax.f32 %v531, 0.0
    %v591 = vmax.f32 %v536, 0.0
    %v592 = vmax.f32 %v541, 0.0
    %v593 = vmax.f32 %v546, 0.0
    %v594 = vmax.f32 %v551, 0.0
    %v595 = vmax.f32 %v556, 0.0
    %v596 = vmax.f32 %v561, 0.0
    %v597 = vmax.f32 %v566, 0.0
    %v598 = vmax.f32 %v571, 0.0
    %v599 = vld [vmem:[%s5] sm:$0xff]
    %v600 = vld [vmem:[%s5 + $0x8] sm:$0xff]
    %v601 = vld [vmem:[%s5 + $0x10] sm:$0xff]
    %v602 = vld [vmem:[%s5 + $0x18] sm:$0xff]
    %v603 = vld [vmem:[%s5 + $0x20] sm:$0xff]
    %v604 = vld [vmem:[%s5 + $0x28] sm:$0xff]
    %v605 = vld [vmem:[%s5 + $0x30] sm:$0xff]
    %v606 = vld [vmem:[%s5 + $0x38] sm:$0xff]
    %v607 = vld [vmem:[%s6] sm:$0x1]
    %v609 = vlaneseq
    %v610 = vshrl.u32 %v609, 7
    %v611 = vsub.s32 0, %v610
    %v612 = vrot.slane %v607, %v611
    %vm614 = vcmask 523264
    %v616 = vsel %vm614, %v574, 0
    %v619 = vsel %vm614, %v575, 0
    %v622 = vsel %vm614, %v576, 0
    %v625 = vsel %vm614, %v577, 0
    %v628 = vsel %vm614, %v578, 0
    %v631 = vsel %vm614, %v579, 0
    %v634 = vsel %vm614, %v580, 0
    %v637 = vsel %vm614, %v581, 0
    %v640 = vsel %vm614, %v582, 0
    %v643 = vsel %vm614, %v583, 0
    %v646 = vsel %vm614, %v584, 0
    %v649 = vsel %vm614, %v585, 0
    %v652 = vsel %vm614, %v586, 0
    %v655 = vsel %vm614, %v587, 0
    %v658 = vsel %vm614, %v588, 0
    %v661 = vsel %vm614, %v589, 0
    %v664 = vsel %vm614, %v590, 0
    %v667 = vsel %vm614, %v591, 0
    %v670 = vsel %vm614, %v592, 0
    %v673 = vsel %vm614, %v593, 0
    %v676 = vsel %vm614, %v594, 0
    %v679 = vsel %vm614, %v595, 0
    %v682 = vsel %vm614, %v596, 0
    %v685 = vsel %vm614, %v597, 0
    %v688 = vsel %vm614, %v598, 0
    %690 = vmatprep.subr.mxu0 0.0
    %691 = vmatpush1.msra.mxu0 0.0
    %692 = vmatprep.subr.mxu0 0.0
    %693 = vmatpush1.msra.mxu0 0.0
    %694 = vmatprep.subr.mxu0 0.0
    %695 = vmatpush1.msra.mxu0 0.0
    %696 = vmatprep.subr.mxu0 0.0
    %697 = vmatpush1.msra.mxu0 0.0
    %698 = vmatprep.subr.mxu0 0.0
    %699 = vmatpush1.msra.mxu0 0.0
    %700 = vmatprep.subr.mxu0 0.0
    %701 = vmatpush1.msra.mxu0 0.0
    %702 = vmatprep.subr.mxu0 0.0
    %703 = vmatpush1.msra.mxu0 0.0
    %704 = vmatprep.subr.mxu0 0.0
    %705 = vmatpush1.msra.mxu0 0.0
    %706 = vmatprep.subr.mxu0 0.0
    %707 = vmatpush1.msra.mxu0 %v606
    %708 = vmatprep.subr.mxu0 0.0
    %709 = vmatpush1.msra.mxu0 %v605
    %710 = vmatprep.subr.mxu0 0.0
    %711 = vmatpush1.msra.mxu0 %v604
    %712 = vmatprep.subr.mxu0 0.0
    %713 = vmatpush1.msra.mxu0 %v603
    %714 = vmatprep.subr.mxu0 0.0
    %715 = vmatpush1.msra.mxu0 %v602
    %716 = vmatprep.subr.mxu0 0.0
    %717 = vmatpush1.msra.mxu0 %v601
    %718 = vmatprep.subr.mxu0 0.0
    %719 = vmatpush1.msra.mxu0 %v600
    %720 = vmatprep.subr.mxu0 0.0
    %721 = vmatpush1.msra.mxu0 %v599
    %722 = vmatprep.subr.mxu0 0.0
    %723 = vmatpush2.msra.mxu0 0.0
    %724 = vmatprep.subr.mxu0 0.0
    %725 = vmatpush2.msra.mxu0 0.0
    %726 = vmatprep.subr.mxu0 0.0
    %727 = vmatpush2.msra.mxu0 0.0
    %728 = vmatprep.subr.mxu0 0.0
    %729 = vmatpush2.msra.mxu0 0.0
    %730 = vmatprep.subr.mxu0 0.0
    %731 = vmatpush2.msra.mxu0 0.0
    %732 = vmatprep.subr.mxu0 0.0
    %733 = vmatpush2.msra.mxu0 0.0
    %734 = vmatprep.subr.mxu0 0.0
    %735 = vmatpush2.msra.mxu0 0.0
    %736 = vmatprep.subr.mxu0 0.0
    %737 = vmatpush2.msra.mxu0 0.0
    %738 = vmatprep.subr.mxu0 0.0
    %739 = vmatpush2.msra.mxu0 0.0
    %740 = vmatprep.subr.mxu0 0.0
    %741 = vmatpush2.msra.mxu0 0.0
    %742 = vmatprep.subr.mxu0 0.0
    %743 = vmatpush2.msra.mxu0 0.0
    %744 = vmatprep.subr.mxu0 0.0
    %745 = vmatpush2.msra.mxu0 0.0
    %746 = vmatprep.subr.mxu0 0.0
    %747 = vmatpush2.msra.mxu0 0.0
    %748 = vmatprep.subr.mxu0 0.0
    %749 = vmatpush2.msra.mxu0 0.0
    %750 = vmatprep.subr.mxu0 0.0
    %751 = vmatpush2.msra.mxu0 0.0
    %752 = vmatprep.subr.mxu0 0.0
    %753 = vmatpush2.msra.mxu0 0.0
    %754 = vmatprep.mubr.f32.mxu0 0.0
    %755 = vmatmul.mubr.f32.gmra.mxu0 %v616
    %v756 = vpop.f32.mrf.mxu0
    %v757 = vadd.f32 %v612, %v756
    %v758 = vpop.f32.mrf.mxu0
    %759 = vmatprep.mubr.f32.mxu0 0.0
    %760 = vmatmul.mubr.f32.gmra.mxu0 %v619
    %v761 = vpop.f32.mrf.mxu0
    %v762 = vadd.f32 %v612, %v761
    %v763 = vpop.f32.mrf.mxu0
    %764 = vmatprep.mubr.f32.mxu0 0.0
    %765 = vmatmul.mubr.f32.gmra.mxu0 %v622
    %v766 = vpop.f32.mrf.mxu0
    %v767 = vadd.f32 %v612, %v766
    %v768 = vpop.f32.mrf.mxu0
    %769 = vmatprep.mubr.f32.mxu0 0.0
    %770 = vmatmul.mubr.f32.gmra.mxu0 %v625
    %v771 = vpop.f32.mrf.mxu0
    %v772 = vadd.f32 %v612, %v771
    %v773 = vpop.f32.mrf.mxu0
    %774 = vmatprep.mubr.f32.mxu0 0.0
    %775 = vmatmul.mubr.f32.gmra.mxu0 %v628
    %v776 = vpop.f32.mrf.mxu0
    %v777 = vadd.f32 %v612, %v776
    %v778 = vpop.f32.mrf.mxu0
    %779 = vmatprep.mubr.f32.mxu0 0.0
    %780 = vmatmul.mubr.f32.gmra.mxu0 %v631
    %v781 = vpop.f32.mrf.mxu0
    %v782 = vadd.f32 %v612, %v781
    %v783 = vpop.f32.mrf.mxu0
    %784 = vmatprep.mubr.f32.mxu0 0.0
    %785 = vmatmul.mubr.f32.gmra.mxu0 %v634
    %v786 = vpop.f32.mrf.mxu0
    %v787 = vadd.f32 %v612, %v786
    %v788 = vpop.f32.mrf.mxu0
    %789 = vmatprep.mubr.f32.mxu0 0.0
    %790 = vmatmul.mubr.f32.gmra.mxu0 %v637
    %v791 = vpop.f32.mrf.mxu0
    %v792 = vadd.f32 %v612, %v791
    %v793 = vpop.f32.mrf.mxu0
    %794 = vmatprep.mubr.f32.mxu0 0.0
    %795 = vmatmul.mubr.f32.gmra.mxu0 %v640
    %v796 = vpop.f32.mrf.mxu0
    %v797 = vadd.f32 %v612, %v796
    %v798 = vpop.f32.mrf.mxu0
    %799 = vmatprep.mubr.f32.mxu0 0.0
    %800 = vmatmul.mubr.f32.gmra.mxu0 %v643
    %v801 = vpop.f32.mrf.mxu0
    %v802 = vadd.f32 %v612, %v801
    %v803 = vpop.f32.mrf.mxu0
    %804 = vmatprep.mubr.f32.mxu0 0.0
    %805 = vmatmul.mubr.f32.gmra.mxu0 %v646
    %v806 = vpop.f32.mrf.mxu0
    %v807 = vadd.f32 %v612, %v806
    %v808 = vpop.f32.mrf.mxu0
    %809 = vmatprep.mubr.f32.mxu0 0.0
    %810 = vmatmul.mubr.f32.gmra.mxu0 %v649
    %v811 = vpop.f32.mrf.mxu0
    %v812 = vadd.f32 %v612, %v811
    %v813 = vpop.f32.mrf.mxu0
    %814 = vmatprep.mubr.f32.mxu0 0.0
    %815 = vmatmul.mubr.f32.gmra.mxu0 %v652
    %v816 = vpop.f32.mrf.mxu0
    %v817 = vadd.f32 %v612, %v816
    %v818 = vpop.f32.mrf.mxu0
    %819 = vmatprep.mubr.f32.mxu0 0.0
    %820 = vmatmul.mubr.f32.gmra.mxu0 %v655
    %v821 = vpop.f32.mrf.mxu0
    %v822 = vadd.f32 %v612, %v821
    %v823 = vpop.f32.mrf.mxu0
    %824 = vmatprep.mubr.f32.mxu0 0.0
    %825 = vmatmul.mubr.f32.gmra.mxu0 %v658
    %v826 = vpop.f32.mrf.mxu0
    %v827 = vadd.f32 %v612, %v826
    %v828 = vpop.f32.mrf.mxu0
    %829 = vmatprep.mubr.f32.mxu0 0.0
    %830 = vmatmul.mubr.f32.gmra.mxu0 %v661
    %v831 = vpop.f32.mrf.mxu0
    %v832 = vadd.f32 %v612, %v831
    %v833 = vpop.f32.mrf.mxu0
    %834 = vmatprep.mubr.f32.mxu0 0.0
    %835 = vmatmul.mubr.f32.gmra.mxu0 %v664
    %v836 = vpop.f32.mrf.mxu0
    %v837 = vadd.f32 %v612, %v836
    %v838 = vpop.f32.mrf.mxu0
    %839 = vmatprep.mubr.f32.mxu0 0.0
    %840 = vmatmul.mubr.f32.gmra.mxu0 %v667
    %v841 = vpop.f32.mrf.mxu0
    %v842 = vadd.f32 %v612, %v841
    %v843 = vpop.f32.mrf.mxu0
    %844 = vmatprep.mubr.f32.mxu0 0.0
    %845 = vmatmul.mubr.f32.gmra.mxu0 %v670
    %v846 = vpop.f32.mrf.mxu0
    %v847 = vadd.f32 %v612, %v846
    %v848 = vpop.f32.mrf.mxu0
    %849 = vmatprep.mubr.f32.mxu0 0.0
    %850 = vmatmul.mubr.f32.gmra.mxu0 %v673
    %v851 = vpop.f32.mrf.mxu0
    %v852 = vadd.f32 %v612, %v851
    %v853 = vpop.f32.mrf.mxu0
    %854 = vmatprep.mubr.f32.mxu0 0.0
    %855 = vmatmul.mubr.f32.gmra.mxu0 %v676
    %v856 = vpop.f32.mrf.mxu0
    %v857 = vadd.f32 %v612, %v856
    %v858 = vpop.f32.mrf.mxu0
    %859 = vmatprep.mubr.f32.mxu0 0.0
    %860 = vmatmul.mubr.f32.gmra.mxu0 %v679
    %v861 = vpop.f32.mrf.mxu0
    %v862 = vadd.f32 %v612, %v861
    %v863 = vpop.f32.mrf.mxu0
    %864 = vmatprep.mubr.f32.mxu0 0.0
    %865 = vmatmul.mubr.f32.gmra.mxu0 %v682
    %v866 = vpop.f32.mrf.mxu0
    %v867 = vadd.f32 %v612, %v866
    %v868 = vpop.f32.mrf.mxu0
    %869 = vmatprep.mubr.f32.mxu0 0.0
    %870 = vmatmul.mubr.f32.gmra.mxu0 %v685
    %v871 = vpop.f32.mrf.mxu0
    %v872 = vadd.f32 %v612, %v871
    %v873 = vpop.f32.mrf.mxu0
    %874 = vmatprep.mubr.f32.mxu0 0.0
    %875 = vmatmul.mubr.f32.gmra.mxu0 %v688
    %v876 = vpop.f32.mrf.mxu0
    %v877 = vadd.f32 %v612, %v876
    %v878 = vpop.f32.mrf.mxu0
    %879 = vdwg.mxu0
    %v880 = vmax.f32 %v757, 0.0
    %v881 = vmax.f32 %v762, 0.0
    %v882 = vmax.f32 %v767, 0.0
    %v883 = vmax.f32 %v772, 0.0
    %v884 = vmax.f32 %v777, 0.0
    %v885 = vmax.f32 %v782, 0.0
    %v886 = vmax.f32 %v787, 0.0
    %v887 = vmax.f32 %v792, 0.0
    %v888 = vmax.f32 %v797, 0.0
    %v889 = vmax.f32 %v802, 0.0
    %v890 = vmax.f32 %v807, 0.0
    %v891 = vmax.f32 %v812, 0.0
    %v892 = vmax.f32 %v817, 0.0
    %v893 = vmax.f32 %v822, 0.0
    %v894 = vmax.f32 %v827, 0.0
    %v895 = vmax.f32 %v832, 0.0
    %v896 = vmax.f32 %v837, 0.0
    %v897 = vmax.f32 %v842, 0.0
    %v898 = vmax.f32 %v847, 0.0
    %v899 = vmax.f32 %v852, 0.0
    %v900 = vmax.f32 %v857, 0.0
    %v901 = vmax.f32 %v862, 0.0
    %v902 = vmax.f32 %v867, 0.0
    %v903 = vmax.f32 %v872, 0.0
    %v904 = vmax.f32 %v877, 0.0
    %v905 = vld [vmem:[%s7] sm:$0xff]
    %v906 = vld [vmem:[%s7 + $0x8] sm:$0xff]
    %v907 = vld [vmem:[%s7 + $0x10] sm:$0xff]
    %v908 = vld [vmem:[%s7 + $0x18] sm:$0xff]
    %v909 = vld [vmem:[%s7 + $0x20] sm:$0xff]
    %v910 = vld [vmem:[%s7 + $0x28] sm:$0xff]
    %v911 = vld [vmem:[%s7 + $0x30] sm:$0xff]
    %v912 = vld [vmem:[%s7 + $0x38] sm:$0xff]
    %v913 = vld [vmem:[%s8] sm:$0x1]
    %v915 = vlaneseq
    %v916 = vshrl.u32 %v915, 7
    %v917 = vsub.s32 0, %v916
    %v918 = vrot.slane %v913, %v917
    %v921 = vsel %vm614, %v880, 0
    %v924 = vsel %vm614, %v881, 0
    %v927 = vsel %vm614, %v882, 0
    %v930 = vsel %vm614, %v883, 0
    %v933 = vsel %vm614, %v884, 0
    %v936 = vsel %vm614, %v885, 0
    %v939 = vsel %vm614, %v886, 0
    %v942 = vsel %vm614, %v887, 0
    %v945 = vsel %vm614, %v888, 0
    %v948 = vsel %vm614, %v889, 0
    %v951 = vsel %vm614, %v890, 0
    %v954 = vsel %vm614, %v891, 0
    %v957 = vsel %vm614, %v892, 0
    %v960 = vsel %vm614, %v893, 0
    %v963 = vsel %vm614, %v894, 0
    %v966 = vsel %vm614, %v895, 0
    %v969 = vsel %vm614, %v896, 0
    %v972 = vsel %vm614, %v897, 0
    %v975 = vsel %vm614, %v898, 0
    %v978 = vsel %vm614, %v899, 0
    %v981 = vsel %vm614, %v900, 0
    %v984 = vsel %vm614, %v901, 0
    %v987 = vsel %vm614, %v902, 0
    %v990 = vsel %vm614, %v903, 0
    %v993 = vsel %vm614, %v904, 0
    %995 = vmatprep.subr.mxu0 0.0
    %996 = vmatpush1.msra.mxu0 0.0
    %997 = vmatprep.subr.mxu0 0.0
    %998 = vmatpush1.msra.mxu0 0.0
    %999 = vmatprep.subr.mxu0 0.0
    %1000 = vmatpush1.msra.mxu0 0.0
    %1001 = vmatprep.subr.mxu0 0.0
    %1002 = vmatpush1.msra.mxu0 0.0
    %1003 = vmatprep.subr.mxu0 0.0
    %1004 = vmatpush1.msra.mxu0 0.0
    %1005 = vmatprep.subr.mxu0 0.0
    %1006 = vmatpush1.msra.mxu0 0.0
    %1007 = vmatprep.subr.mxu0 0.0
    %1008 = vmatpush1.msra.mxu0 0.0
    %1009 = vmatprep.subr.mxu0 0.0
    %1010 = vmatpush1.msra.mxu0 0.0
    %1011 = vmatprep.subr.mxu0 0.0
    %1012 = vmatpush1.msra.mxu0 %v912
    %1013 = vmatprep.subr.mxu0 0.0
    %1014 = vmatpush1.msra.mxu0 %v911
    %1015 = vmatprep.subr.mxu0 0.0
    %1016 = vmatpush1.msra.mxu0 %v910
    %1017 = vmatprep.subr.mxu0 0.0
    %1018 = vmatpush1.msra.mxu0 %v909
    %1019 = vmatprep.subr.mxu0 0.0
    %1020 = vmatpush1.msra.mxu0 %v908
    %1021 = vmatprep.subr.mxu0 0.0
    %1022 = vmatpush1.msra.mxu0 %v907
    %1023 = vmatprep.subr.mxu0 0.0
    %1024 = vmatpush1.msra.mxu0 %v906
    %1025 = vmatprep.subr.mxu0 0.0
    %1026 = vmatpush1.msra.mxu0 %v905
    %1027 = vmatprep.subr.mxu0 0.0
    %1028 = vmatpush2.msra.mxu0 0.0
    %1029 = vmatprep.subr.mxu0 0.0
    %1030 = vmatpush2.msra.mxu0 0.0
    %1031 = vmatprep.subr.mxu0 0.0
    %1032 = vmatpush2.msra.mxu0 0.0
    %1033 = vmatprep.subr.mxu0 0.0
    %1034 = vmatpush2.msra.mxu0 0.0
    %1035 = vmatprep.subr.mxu0 0.0
    %1036 = vmatpush2.msra.mxu0 0.0
    %1037 = vmatprep.subr.mxu0 0.0
    %1038 = vmatpush2.msra.mxu0 0.0
    %1039 = vmatprep.subr.mxu0 0.0
    %1040 = vmatpush2.msra.mxu0 0.0
    %1041 = vmatprep.subr.mxu0 0.0
    %1042 = vmatpush2.msra.mxu0 0.0
    %1043 = vmatprep.subr.mxu0 0.0
    %1044 = vmatpush2.msra.mxu0 0.0
    %1045 = vmatprep.subr.mxu0 0.0
    %1046 = vmatpush2.msra.mxu0 0.0
    %1047 = vmatprep.subr.mxu0 0.0
    %1048 = vmatpush2.msra.mxu0 0.0
    %1049 = vmatprep.subr.mxu0 0.0
    %1050 = vmatpush2.msra.mxu0 0.0
    %1051 = vmatprep.subr.mxu0 0.0
    %1052 = vmatpush2.msra.mxu0 0.0
    %1053 = vmatprep.subr.mxu0 0.0
    %1054 = vmatpush2.msra.mxu0 0.0
    %1055 = vmatprep.subr.mxu0 0.0
    %1056 = vmatpush2.msra.mxu0 0.0
    %1057 = vmatprep.subr.mxu0 0.0
    %1058 = vmatpush2.msra.mxu0 0.0
    %1059 = vmatprep.mubr.f32.mxu0 0.0
    %1060 = vmatmul.mubr.f32.gmra.mxu0 %v921
    %v1061 = vpop.f32.mrf.mxu0
    %v1062 = vadd.f32 %v918, %v1061
    %v1063 = vpop.f32.mrf.mxu0
    %1064 = vmatprep.mubr.f32.mxu0 0.0
    %1065 = vmatmul.mubr.f32.gmra.mxu0 %v924
    %v1066 = vpop.f32.mrf.mxu0
    %v1067 = vadd.f32 %v918, %v1066
    %v1068 = vpop.f32.mrf.mxu0
    %1069 = vmatprep.mubr.f32.mxu0 0.0
    %1070 = vmatmul.mubr.f32.gmra.mxu0 %v927
    %v1071 = vpop.f32.mrf.mxu0
    %v1072 = vadd.f32 %v918, %v1071
    %v1073 = vpop.f32.mrf.mxu0
    %1074 = vmatprep.mubr.f32.mxu0 0.0
    %1075 = vmatmul.mubr.f32.gmra.mxu0 %v930
    %v1076 = vpop.f32.mrf.mxu0
    %v1077 = vadd.f32 %v918, %v1076
    %v1078 = vpop.f32.mrf.mxu0
    %1079 = vmatprep.mubr.f32.mxu0 0.0
    %1080 = vmatmul.mubr.f32.gmra.mxu0 %v933
    %v1081 = vpop.f32.mrf.mxu0
    %v1082 = vadd.f32 %v918, %v1081
    %v1083 = vpop.f32.mrf.mxu0
    %1084 = vmatprep.mubr.f32.mxu0 0.0
    %1085 = vmatmul.mubr.f32.gmra.mxu0 %v936
    %v1086 = vpop.f32.mrf.mxu0
    %v1087 = vadd.f32 %v918, %v1086
    %v1088 = vpop.f32.mrf.mxu0
    %1089 = vmatprep.mubr.f32.mxu0 0.0
    %1090 = vmatmul.mubr.f32.gmra.mxu0 %v939
    %v1091 = vpop.f32.mrf.mxu0
    %v1092 = vadd.f32 %v918, %v1091
    %v1093 = vpop.f32.mrf.mxu0
    %1094 = vmatprep.mubr.f32.mxu0 0.0
    %1095 = vmatmul.mubr.f32.gmra.mxu0 %v942
    %v1096 = vpop.f32.mrf.mxu0
    %v1097 = vadd.f32 %v918, %v1096
    %v1098 = vpop.f32.mrf.mxu0
    %1099 = vmatprep.mubr.f32.mxu0 0.0
    %1100 = vmatmul.mubr.f32.gmra.mxu0 %v945
    %v1101 = vpop.f32.mrf.mxu0
    %v1102 = vadd.f32 %v918, %v1101
    %v1103 = vpop.f32.mrf.mxu0
    %1104 = vmatprep.mubr.f32.mxu0 0.0
    %1105 = vmatmul.mubr.f32.gmra.mxu0 %v948
    %v1106 = vpop.f32.mrf.mxu0
    %v1107 = vadd.f32 %v918, %v1106
    %v1108 = vpop.f32.mrf.mxu0
    %1109 = vmatprep.mubr.f32.mxu0 0.0
    %1110 = vmatmul.mubr.f32.gmra.mxu0 %v951
    %v1111 = vpop.f32.mrf.mxu0
    %v1112 = vadd.f32 %v918, %v1111
    %v1113 = vpop.f32.mrf.mxu0
    %1114 = vmatprep.mubr.f32.mxu0 0.0
    %1115 = vmatmul.mubr.f32.gmra.mxu0 %v954
    %v1116 = vpop.f32.mrf.mxu0
    %v1117 = vadd.f32 %v918, %v1116
    %v1118 = vpop.f32.mrf.mxu0
    %1119 = vmatprep.mubr.f32.mxu0 0.0
    %1120 = vmatmul.mubr.f32.gmra.mxu0 %v957
    %v1121 = vpop.f32.mrf.mxu0
    %v1122 = vadd.f32 %v918, %v1121
    %v1123 = vpop.f32.mrf.mxu0
    %1124 = vmatprep.mubr.f32.mxu0 0.0
    %1125 = vmatmul.mubr.f32.gmra.mxu0 %v960
    %v1126 = vpop.f32.mrf.mxu0
    %v1127 = vadd.f32 %v918, %v1126
    %v1128 = vpop.f32.mrf.mxu0
    %1129 = vmatprep.mubr.f32.mxu0 0.0
    %1130 = vmatmul.mubr.f32.gmra.mxu0 %v963
    %v1131 = vpop.f32.mrf.mxu0
    %v1132 = vadd.f32 %v918, %v1131
    %v1133 = vpop.f32.mrf.mxu0
    %1134 = vmatprep.mubr.f32.mxu0 0.0
    %1135 = vmatmul.mubr.f32.gmra.mxu0 %v966
    %v1136 = vpop.f32.mrf.mxu0
    %v1137 = vadd.f32 %v918, %v1136
    %v1138 = vpop.f32.mrf.mxu0
    %1139 = vmatprep.mubr.f32.mxu0 0.0
    %1140 = vmatmul.mubr.f32.gmra.mxu0 %v969
    %v1141 = vpop.f32.mrf.mxu0
    %v1142 = vadd.f32 %v918, %v1141
    %v1143 = vpop.f32.mrf.mxu0
    %1144 = vmatprep.mubr.f32.mxu0 0.0
    %1145 = vmatmul.mubr.f32.gmra.mxu0 %v972
    %v1146 = vpop.f32.mrf.mxu0
    %v1147 = vadd.f32 %v918, %v1146
    %v1148 = vpop.f32.mrf.mxu0
    %1149 = vmatprep.mubr.f32.mxu0 0.0
    %1150 = vmatmul.mubr.f32.gmra.mxu0 %v975
    %v1151 = vpop.f32.mrf.mxu0
    %v1152 = vadd.f32 %v918, %v1151
    %v1153 = vpop.f32.mrf.mxu0
    %1154 = vmatprep.mubr.f32.mxu0 0.0
    %1155 = vmatmul.mubr.f32.gmra.mxu0 %v978
    %v1156 = vpop.f32.mrf.mxu0
    %v1157 = vadd.f32 %v918, %v1156
    %v1158 = vpop.f32.mrf.mxu0
    %1159 = vmatprep.mubr.f32.mxu0 0.0
    %1160 = vmatmul.mubr.f32.gmra.mxu0 %v981
    %v1161 = vpop.f32.mrf.mxu0
    %v1162 = vadd.f32 %v918, %v1161
    %v1163 = vpop.f32.mrf.mxu0
    %1164 = vmatprep.mubr.f32.mxu0 0.0
    %1165 = vmatmul.mubr.f32.gmra.mxu0 %v984
    %v1166 = vpop.f32.mrf.mxu0
    %v1167 = vadd.f32 %v918, %v1166
    %v1168 = vpop.f32.mrf.mxu0
    %1169 = vmatprep.mubr.f32.mxu0 0.0
    %1170 = vmatmul.mubr.f32.gmra.mxu0 %v987
    %v1171 = vpop.f32.mrf.mxu0
    %v1172 = vadd.f32 %v918, %v1171
    %v1173 = vpop.f32.mrf.mxu0
    %1174 = vmatprep.mubr.f32.mxu0 0.0
    %1175 = vmatmul.mubr.f32.gmra.mxu0 %v990
    %v1176 = vpop.f32.mrf.mxu0
    %v1177 = vadd.f32 %v918, %v1176
    %v1178 = vpop.f32.mrf.mxu0
    %1179 = vmatprep.mubr.f32.mxu0 0.0
    %1180 = vmatmul.mubr.f32.gmra.mxu0 %v993
    %v1181 = vpop.f32.mrf.mxu0
    %v1182 = vadd.f32 %v918, %v1181
    %v1183 = vpop.f32.mrf.mxu0
    %1184 = vdwg.mxu0
    %1185 = vst [vmem:[#allocation2] sm:$0xff] %v1062
    %1186 = vst [vmem:[#allocation2 + $0x8] sm:$0xff] %v1067
    %1187 = vst [vmem:[#allocation2 + $0x10] sm:$0xff] %v1072
    %1188 = vst [vmem:[#allocation2 + $0x18] sm:$0xff] %v1077
    %1189 = vst [vmem:[#allocation2 + $0x20] sm:$0xff] %v1082
    %1190 = vst [vmem:[#allocation2 + $0x28] sm:$0xff] %v1087
    %1191 = vst [vmem:[#allocation2 + $0x30] sm:$0xff] %v1092
    %1192 = vst [vmem:[#allocation2 + $0x38] sm:$0xff] %v1097
    %1193 = vst [vmem:[#allocation2 + $0x40] sm:$0xff] %v1102
    %1194 = vst [vmem:[#allocation2 + $0x48] sm:$0xff] %v1107
    %1195 = vst [vmem:[#allocation2 + $0x50] sm:$0xff] %v1112
    %1196 = vst [vmem:[#allocation2 + $0x58] sm:$0xff] %v1117
    %1197 = vst [vmem:[#allocation2 + $0x60] sm:$0xff] %v1122
    %1198 = vst [vmem:[#allocation2 + $0x68] sm:$0xff] %v1127
    %1199 = vst [vmem:[#allocation2 + $0x70] sm:$0xff] %v1132
    %1200 = vst [vmem:[#allocation2 + $0x78] sm:$0xff] %v1137
    %1201 = vst [vmem:[#allocation2 + $0x80] sm:$0xff] %v1142
    %1202 = vst [vmem:[#allocation2 + $0x88] sm:$0xff] %v1147
    %1203 = vst [vmem:[#allocation2 + $0x90] sm:$0xff] %v1152
    %1204 = vst [vmem:[#allocation2 + $0x98] sm:$0xff] %v1157
    %1205 = vst [vmem:[#allocation2 + $0xa0] sm:$0xff] %v1162
    %1206 = vst [vmem:[#allocation2 + $0xa8] sm:$0xff] %v1167
    %1207 = vst [vmem:[#allocation2 + $0xb0] sm:$0xff] %v1172
    %1208 = vst [vmem:[#allocation2 + $0xb8] sm:$0xff] %v1177
    %1209 = vst [vmem:[#allocation2 + $0xc0] sm:$0xff] %v1182
    // Predicated region
    $region38: #{tpu_custom_call.1} parent=1 // pred_check
      _
    $region39: #{tpu_custom_call.1} parent=1 // pred_check_branch
      %1211 = sbr.rel (0) target = $region41
    $region40: #{tpu_custom_call.1} parent=1 // pred_region
      %s1213 = ssub.s32 3200, 3200
      %1214 = vsyncadd [#allocation3], %s1213
      %s1215 = sshll.u32 [#allocation2], 4
      %s1216 = int_to_ptr.vmem [resolvable:$true] %s1215
      %1221 = dma.vmem_to_hbm [thread:$0]  %s1216, 3200, %s9, [#allocation3], 128, 128, 8
    $region41: #{tpu_custom_call.1} parent=1 // pred_fallthru
      _
    // Predicated region
    $region42: #{tpu_custom_call.1} parent=1 // pred_check
      _
    $region43: #{tpu_custom_call.1} parent=1 // pred_check_branch
      %1223 = sbr.rel (0) target = $region45
    $region44: #{tpu_custom_call.1} parent=1 // pred_region
      %1224 = dma.done [#allocation3], 3200
    $region45: #{tpu_custom_call.1} parent=1 // pred_fallthru
      _
    %1225 = vsyncpa [#allocation3], 1

</llo_original>
